<compile_context>
chip_gen: v5e
topology: v5e:2x2
jax: 0.10.0
libtpu: 0.0.40
codegen_flags: <defaults>
</compile_context>

<pallas_src>
import math

import jax
import jax.numpy as jnp
from jax.experimental import pallas as pl
from jax.experimental.pallas import tpu as pltpu


# --------------------------- hardware sizing ------------------------------- #

_DEFAULT_VMEM = 64 * 1024 * 1024  # conservative fallback (v7x physical VMEM per TC)


def _vmem_capacity_bytes():
    try:
        return int(pltpu.get_tpu_info().vmem_capacity_bytes)
    except Exception:
        return _DEFAULT_VMEM


def _vmem_limit_bytes():
    # Raise the scoped-VMEM limit (default 16/32 MiB) but stay under physical
    # capacity (128 MiB v5e/v6e, 64 MiB per-TC v7x).
    return int(min(100 * 1024 * 1024, _vmem_capacity_bytes() * 3 // 4))


def _vmem_budget_bytes():
    # Size tiles against the limit we actually request, with ~20% headroom for
    # Mosaic-internal scratch.  (Previously capacity//4 AND a 2x double-buffer
    # factor => ~8x over-conservative; now counted explicitly, once.)
    return (_vmem_limit_bytes() * 4) // 5


def _compiler_params(semantics):
    return pltpu.CompilerParams(dimension_semantics=semantics,
                                vmem_limit_bytes=_vmem_limit_bytes())


def _pick_linear_tiles(M, K, R, N, c_item, o_item):
    """Jointly pick (tm, tn) under the scoped-VMEM budget."""
    budget = _vmem_budget_bytes()
    m_cap = min(1024, max(16, ((M + 15) // 16) * 16))

    def fits(tm, tn):
        x_b = 2 * tm * K * c_item             # double-buffered activation tile
        o_b = 2 * tm * tn * o_item            # double-buffered output tile (out dtype)
        w_b = 2 * (K * R + R * tn) * c_item   # double-buffered weight tiles
        d_b = tm * R * c_item                 # persistent down-projection scratch
        epi = tm * tn * 4 + tm * R * 4        # f32 MXU results before the cast
        return x_b + o_b + w_b + d_b + epi <= budget

    def max_tm(tn):
        tm = m_cap
        while tm >= 16 and not fits(tm, tn):
            tm -= 16                          # keep multiple of 16 (bf16 packing)
        return tm

    # Prefer no N tiling at all: single lane-dense output slab, down projection
    # computed exactly once per row block, half the grid steps.
    tn = N
    tm = max_tm(tn)
    if tm < min(256, m_cap):
        # full-N slab leaves no room for a useful row tile -> 1024-lane N tiles
        tn = min(N, 1024)
        tm = max(max_tm(tn), 16)

    if M <= tm:
        if M >= 256:
            # enough rows: split into >=2 row blocks so both v7x TCs get work
            tm = ((pl.cdiv(M, 2) + 15) // 16) * 16
        else:
            tm = M                            # block == full first dim (always legal)
    return tm, tn


def _pick_spatial_tile(n, hw, C, Cout, R, c_item, o_item):
    budget = _vmem_budget_bytes()
    per_col = (2 * C * c_item + 2 * Cout * o_item   # double-buffered x / out tiles
               + (R + Cout) * 4)                    # f32 intermediates
    ts = budget // max(per_col, 1)
    ts = max(128, min(8192, (ts // 128) * 128))     # lane alignment
    if hw <= ts:
        ts = hw
    # Guarantee >= 2 total grid steps on single-image inputs (v7x megacore).
    if n == 1 and hw > 128 and ts >= hw:
        ts = max(128, ((pl.cdiv(hw, 2) + 127) // 128) * 128)
    return ts


# ----------------------------- Pallas kernels ------------------------------ #

def _lora_rows_fused_kernel(x_ref, wd_ref, wu_ref, o_ref):
    # Single N tile (no j axis): x_ref (tm, K), wd (K, R), wu (R, N), o (tm, N).
    down = jnp.dot(x_ref[...], wd_ref[...], preferred_element_type=jnp.float32)
    up = jnp.dot(down.astype(wu_ref.dtype), wu_ref[...],
                 preferred_element_type=jnp.float32)
    o_ref[...] = up.astype(o_ref.dtype)


def _lora_rows_tiled_kernel(x_ref, wd_ref, wu_ref, o_ref, down_ref):
    # N is tiled: the down projection only depends on the row block (i), so
    # compute it once at j == 0 into VMEM scratch and reuse it for every j.
    @pl.when(pl.program_id(1) == 0)
    def _():
        d = jnp.dot(x_ref[...], wd_ref[...], preferred_element_type=jnp.float32)
        down_ref[...] = d.astype(down_ref.dtype)

    up = jnp.dot(down_ref[...], wu_ref[...], preferred_element_type=jnp.float32)
    o_ref[...] = up.astype(o_ref.dtype)


def _lora_conv1x1_kernel(x_ref, wd_ref, wu_ref, o_ref):
    # x_ref: (1, C, ts)  wd_ref: (R, C)  wu_ref: (Cout, R)  o_ref: (1, Cout, ts)
    down = jnp.dot(wd_ref[...], x_ref[0], preferred_element_type=jnp.float32)
    up = jnp.dot(wu_ref[...], down.astype(wu_ref.dtype),
                 preferred_element_type=jnp.float32)
    o_ref[0] = up.astype(o_ref.dtype)


# ------------------------------- Wrappers ----------------------------------- #

def _lora_scale(alpha, lora_dim, multiplier):
    if alpha is None or alpha == 0:
        alpha = lora_dim          # module: "if alpha == 0 or None, alpha is rank"
    return float(multiplier) * (float(alpha) / float(lora_dim))


def lora_linear_forward(x, w_down, w_up, *, alpha, lora_dim, multiplier,
                        compute_dtype=jnp.bfloat16):
    """Linear LoRA.  x: (..., in_dim).  w_down: (in_dim, R).  w_up: (R, out_dim)."""
    out_dtype = x.dtype
    scale = _lora_scale(alpha, lora_dim, multiplier)
    K = x.shape[-1]
    R, N = w_up.shape
    assert w_down.shape == (K, R), "w_down must be (in_dim, R) = lora_down.weight.T"

    x2d = x.reshape(-1, K).astype(compute_dtype)                 # free reshape
    wd = w_down.astype(compute_dtype)
    # fold the scalar into the tiny up-projection weight (host-side, negligible)
    wu = (w_up.astype(jnp.float32) * scale).astype(compute_dtype)

    M = x2d.shape[0]
    c_item = jnp.dtype(compute_dtype).itemsize
    o_item = jnp.dtype(out_dtype).itemsize
    tm, tn = _pick_linear_tiles(M, K, R, N, c_item, o_item)
    grid = (pl.cdiv(M, tm), pl.cdiv(N, tn))

    cost = pl.CostEstimate(
        flops=2 * M * R * (K + N),
        transcendentals=0,
        bytes_accessed=(M * K * c_item + M * N * o_item
                        + K * R * c_item + R * N * c_item),
    )

    in_specs = [
        pl.BlockSpec((tm, K), lambda i, j: (i, 0)),      # activation rows
        pl.BlockSpec((K, R), lambda i, j: (0, 0)),       # full down weight
        pl.BlockSpec((R, tn), lambda i, j: (0, j)),      # up-weight columns
    ]
    out_spec = pl.BlockSpec((tm, tn), lambda i, j: (i, j))

    if grid[1] == 1:
        # No N tiling: simplest kernel, no scratch round-trip.
        out2d = pl.pallas_call(
            _lora_rows_fused_kernel,
            out_shape=jax.ShapeDtypeStruct((M, N), out_dtype),
            grid_spec=pltpu.PrefetchScalarGridSpec(
                num_scalar_prefetch=0, grid=grid,
                in_specs=in_specs, out_specs=out_spec),
            compiler_params=_compiler_params(("parallel", "arbitrary")),
            cost_estimate=cost,
        )(x2d, wd, wu)
    else:
        # N tiled: persistent (tm, R) scratch carries the down projection across j.
        out2d = pl.pallas_call(
            _lora_rows_tiled_kernel,
            out_shape=jax.ShapeDtypeStruct((M, N), out_dtype),
            grid_spec=pltpu.PrefetchScalarGridSpec(
                num_scalar_prefetch=0, grid=grid,
                in_specs=in_specs, out_specs=out_spec,
                scratch_shapes=[pltpu.VMEM((tm, R), compute_dtype)]),
            compiler_params=_compiler_params(("parallel", "arbitrary")),
            cost_estimate=cost,
        )(x2d, wd, wu)
    return out2d.reshape(x.shape[:-1] + (N,))


def lora_conv1x1_forward(x_nchw, w_down, w_up, *, alpha, lora_dim, multiplier,
                         kernel_size=(1, 1), stride=(1, 1), padding=(0, 0),
                         compute_dtype=jnp.bfloat16):
    """Conv2d LoRA, 1x1 / stride 1 / pad 0 only.

    x_nchw: (N, C_in, H, W)   (PyTorch layout)
    w_down: (R, C_in)    -- lora_down.weight[:, :, 0, 0]
    w_up:   (C_out, R)   -- lora_up.weight[:, :, 0, 0]

    No layout transposes: x is reshaped (free view) to (N, C, H*W); the kernel
    contracts over C with the lane-dense H*W axis last.
    """
    if tuple(kernel_size) != (1, 1) or tuple(stride) != (1, 1) or tuple(padding) != (0, 0):
        # TODO(synk): general kxk / strided / padded lora_down convs need an
        # im2col (or windowed-DMA) stage; not implemented here.
        raise NotImplementedError("only 1x1 / stride 1 / pad 0 conv LoRA is lowered")

    out_dtype = x_nchw.dtype
    scale = _lora_scale(alpha, lora_dim, multiplier)
    n, c, h, w = x_nchw.shape
    cout, r = w_up.shape
    assert w_down.shape == (r, c), "w_down must be (R, C_in)"
    hw = h * w

    x3d = x_nchw.reshape(n, c, hw).astype(compute_dtype)         # free reshape
    wd = w_down.astype(compute_dtype)
    wu = (w_up.astype(jnp.float32) * scale).astype(compute_dtype)

    c_item = jnp.dtype(compute_dtype).itemsize
    o_item = jnp.dtype(out_dtype).itemsize
    ts = _pick_spatial_tile(n, hw, c, cout, r, c_item, o_item)
    grid = (n, pl.cdiv(hw, ts))

    cost = pl.CostEstimate(
        flops=2 * n * hw * r * (c + cout),
        transcendentals=0,
        bytes_accessed=(n * c * hw * c_item + n * cout * hw * o_item
                        + (r * c + cout * r) * c_item),
    )

    out3d = pl.pallas_call(
        _lora_conv1x1_kernel,
        out_shape=jax.ShapeDtypeStruct((n, cout, hw), out_dtype),
        grid_spec=pltpu.PrefetchScalarGridSpec(
            num_scalar_prefetch=0,
            grid=grid,
            in_specs=[
                pl.BlockSpec((1, c, ts), lambda b, s: (b, 0, s)),  # one image, spatial tile
                pl.BlockSpec((r, c), lambda b, s: (0, 0)),         # full down weight
                pl.BlockSpec((cout, r), lambda b, s: (0, 0)),      # full up weight
            ],
            out_specs=pl.BlockSpec((1, cout, ts), lambda b, s: (b, 0, s)),
        ),
        compiler_params=_compiler_params(("parallel", "parallel")),
        cost_estimate=cost,
    )(x3d, wd, wu)
    return out3d.reshape(n, cout, h, w)


# --------------------------------- Main -------------------------------------- #

if __name__ == "__main__":
    key = jax.random.PRNGKey(0)
    k_x, k_xc, k_wd, k_wu, k_wdc, k_wuc = jax.random.split(key, 6)

    lora_dim = 4
    alpha = 1.0
    multiplier = 1.0
    scale = multiplier * alpha / lora_dim

    # ---------------- Linear case: batch=2, seq=8, in=32, out=32 ------------
    batch, seq, in_dim, out_dim = 2, 8, 32, 32
    x = jax.random.normal(k_x, (batch, seq, in_dim), jnp.float32).astype(jnp.bfloat16)

    # kaiming_uniform_(a=sqrt(5)) on a (R, in) weight -> U(-1/sqrt(in), 1/sqrt(in))
    bound = 1.0 / math.sqrt(in_dim)
    w_down = jax.random.uniform(k_wd, (in_dim, lora_dim), jnp.float32,
                                -bound, bound).astype(jnp.bfloat16)
    w_up = (0.01 * jax.random.normal(k_wu, (lora_dim, out_dim), jnp.float32)
            ).astype(jnp.bfloat16)

    out_lin = lora_linear_forward(x, w_down, w_up, alpha=alpha,
                                  lora_dim=lora_dim, multiplier=multiplier)
    out_lin = jax.block_until_ready(out_lin)

    x32, wd32, wu32 = (a.astype(jnp.float32) for a in (x, w_down, w_up))
    ref_lin = (scale * ((x32.reshape(-1, in_dim) @ wd32) @ wu32)).reshape(
        batch, seq, out_dim)
    assert out_lin.shape == (batch, seq, out_dim)
    assert out_lin.dtype == x.dtype
    assert jnp.allclose(out_lin.astype(jnp.float32), ref_lin, atol=1e-3, rtol=2e-2)

    # ---------------- Conv2d (1x1): N=2, C_in=4, 16x16 spatial, C_out=8 -----
    n, c_in, h, w_sp, c_out = 2, 4, 16, 16, 8
    xc = jax.random.normal(k_xc, (n, c_in, h, w_sp), jnp.float32).astype(jnp.bfloat16)
    bound_c = 1.0 / math.sqrt(c_in)         # fan_in of a 1x1 conv = c_in
    w_down_c = jax.random.uniform(k_wdc, (lora_dim, c_in), jnp.float32,
                                  -bound_c, bound_c).astype(jnp.bfloat16)    # (R, C_in)
    w_up_c = (0.01 * jax.random.normal(k_wuc, (c_out, lora_dim), jnp.float32)
              ).astype(jnp.bfloat16)                                         # (C_out, R)

    out_conv = lora_conv1x1_forward(xc, w_down_c, w_up_c, alpha=alpha,
                                    lora_dim=lora_dim, multiplier=multiplier)
    out_conv = jax.block_until_ready(out_conv)

    xc32, wdc32, wuc32 = (a.astype(jnp.float32) for a in (xc, w_down_c, w_up_c))
    down_ref = jnp.einsum("rc,nchw->nrhw", wdc32, xc32)
    ref_conv = scale * jnp.einsum("or,nrhw->nohw", wuc32, down_ref)
    assert out_conv.shape == (n, c_out, h, w_sp)
    assert out_conv.dtype == xc.dtype
    assert jnp.allclose(out_conv.astype(jnp.float32), ref_conv, atol=1e-3, rtol=2e-2)

    print("KERNEL_OK")
</pallas_src>

<mosaic_0001>
module attributes {stable_mosaic.version = 11 : i64} {
  func.func @_lora_rows_fused_kernel(%arg0: i32, %arg1: i32, %arg2: memref<16x32xbf16, #tpu.memory_space<vmem>>, %arg3: memref<32x4xbf16, #tpu.memory_space<vmem>>, %arg4: memref<4x32xbf16, #tpu.memory_space<vmem>>, %arg5: memref<16x32xbf16, #tpu.memory_space<vmem>>) attributes {dimension_semantics = [#tpu.dimension_semantics<parallel>, #tpu.dimension_semantics<arbitrary>], iteration_bounds = array<i64: 1, 1>, scalar_prefetch = 0 : i64, scratch_operands = 0 : i64, tpu.core_type = #tpu.core_type<tc>, window_params = [{transform_indices = @transform_0, window_bounds = array<i64: 16, 32>}, {pipeline_mode = #tpu.pipeline_mode<synchronous>, transform_indices = @transform_1, window_bounds = array<i64: 32, 4>}, {transform_indices = @transform_2, window_bounds = array<i64: 4, 32>}, {transform_indices = @transform_3, window_bounds = array<i64: 16, 32>}]} {
    %c0 = arith.constant 0 : index
    %c0_0 = arith.constant 0 : index
    %0 = vector.load %arg2[%c0, %c0_0] : memref<16x32xbf16, #tpu.memory_space<vmem>>, vector<16x32xbf16>
    %c0_1 = arith.constant 0 : index
    %c0_2 = arith.constant 0 : index
    %1 = vector.load %arg3[%c0_1, %c0_2] : memref<32x4xbf16, #tpu.memory_space<vmem>>, vector<32x4xbf16>
    %cst = arith.constant dense<0.000000e+00> : vector<16x4xf32>
    %2 = tpu.matmul %0, %1, %cst {dimension_numbers = #tpu.dot_dimension_numbers<[1], [0], [0], [1], [0, 0, 1, 1], [], []>} : vector<16x32xbf16>, vector<32x4xbf16>, vector<16x4xf32> -> vector<16x4xf32>
    %3 = arith.truncf %2 : vector<16x4xf32> to vector<16x4xbf16>
    %c0_3 = arith.constant 0 : index
    %c0_4 = arith.constant 0 : index
    %4 = vector.load %arg4[%c0_3, %c0_4] : memref<4x32xbf16, #tpu.memory_space<vmem>>, vector<4x32xbf16>
    %cst_5 = arith.constant dense<0.000000e+00> : vector<16x32xf32>
    %5 = tpu.matmul %3, %4, %cst_5 {dimension_numbers = #tpu.dot_dimension_numbers<[1], [0], [0], [1], [0, 0, 1, 1], [], []>} : vector<16x4xbf16>, vector<4x32xbf16>, vector<16x32xf32> -> vector<16x32xf32>
    %6 = arith.truncf %5 : vector<16x32xf32> to vector<16x32xbf16>
    %c0_6 = arith.constant 0 : index
    %c0_7 = arith.constant 0 : index
    %7 = vector.load %arg5[%c0_6, %c0_7] : memref<16x32xbf16, #tpu.memory_space<vmem>>, vector<16x32xbf16>
    tpu.vector_store %arg5[%c0_6, %c0_7], %6 {strides = array<i32>} : memref<16x32xbf16, #tpu.memory_space<vmem>>, vector<16x32xbf16>,
    return
  }
  func.func @transform_0(%arg0: i32, %arg1: i32) -> (i32, i32) {
    %c0_i32 = arith.constant 0 : i32
    %c0_i32_0 = arith.constant 0 : i32
    return %arg0, %c0_i32 : i32, i32
  }
  func.func @transform_1(%arg0: i32, %arg1: i32) -> (i32, i32) {
    %c0_i32 = arith.constant 0 : i32
    %c0_i32_0 = arith.constant 0 : i32
    %c0_i32_1 = arith.constant 0 : i32
    return %c0_i32, %c0_i32_0 : i32, i32
  }
  func.func @transform_2(%arg0: i32, %arg1: i32) -> (i32, i32) {
    %c0_i32 = arith.constant 0 : i32
    %c0_i32_0 = arith.constant 0 : i32
    return %c0_i32, %arg1 : i32, i32
  }
  func.func @transform_3(%arg0: i32, %arg1: i32) -> (i32, i32) {
    %c0_i32 = arith.constant 0 : i32
    return %arg0, %arg1 : i32, i32
  }
}

</mosaic_0001>

<llo_original>
// kernel: tpu_custom_call.1
$region0: #{tpu_custom_call.1}
  #allocation0 [shape = 'u32[]', space=smem, size = 0x4, offset = 0x4, fixed_abs, tag = 'smem constant byte address 0x4 - core index']
  #allocation1 [shape = 'u32[72,128]{1,0:T(1,128)}', space=vmem, size = 0x9000, scoped, tag = 'internal scratch']
  %s0 = inlined_call_operand.vmem [shape: bf16[16,32], index: 0, kind: input, shape index: {}]
  %s1 = inlined_call_operand.vmem [shape: bf16[32,4], index: 1, kind: input, shape index: {}]
  %s2 = inlined_call_operand.vmem [shape: bf16[4,32], index: 2, kind: input, shape index: {}]
  %s3 = inlined_call_operand.hbm [shape: bf16[16,32], index: 3, kind: output, shape index: {}]
  %s4 = sld [smem:[#allocation0]]
  $region22: #{tpu_custom_call.1} parent=0
    _
  %s6 = ssub.s32 1, %s4
  %s7 = scalar_select 0, %s6, %s4
  $region1: #{tpu_custom_call.1} parent=0
    #allocation2 [shape = 'u8[4096]{0}', space=vmem, size = 0x1000, scoped, tag = 'output window, operand 0, single buffered']
    #allocation3 [shape = 's32[1]{0}', space=sflag, size = 0x4, scoped, tag = 'scoped memory for tpu_custom_call.1']
    %8 = vsyncpa [#allocation3], 0
    // Predicated region
    $region2: #{tpu_custom_call.1} parent=1 // pred_check
      _
    $region3: #{tpu_custom_call.1} parent=1 // pred_check_branch
      %10 = sbr.rel (0) target = $region5
    $region4: #{tpu_custom_call.1} parent=1 // pred_region
      _
    $region5: #{tpu_custom_call.1} parent=1 // pred_fallthru
      _
    // Predicated region
    $region6: #{tpu_custom_call.1} parent=1 // pred_check
      _
    $region7: #{tpu_custom_call.1} parent=1 // pred_check_branch
      %12 = sbr.rel (0) target = $region9
    $region8: #{tpu_custom_call.1} parent=1 // pred_region
      _
    $region9: #{tpu_custom_call.1} parent=1 // pred_fallthru
      _
    // Predicated region
    $region10: #{tpu_custom_call.1} parent=1 // pred_check
      _
    $region11: #{tpu_custom_call.1} parent=1 // pred_check_branch
      %14 = sbr.rel (0) target = $region13
    $region12: #{tpu_custom_call.1} parent=1 // pred_region
      _
    $region13: #{tpu_custom_call.1} parent=1 // pred_fallthru
      _
    %v16 = vld [vmem:[%s0] sm:$0xf]
    %v17 = vld [vmem:[%s0 + $0x4] sm:$0xf]
    %v18 = vld [vmem:[%s1] sm:$0xf]
    %v19 = vld [vmem:[%s1 + $0x4] sm:$0xf]
    %v20 = vld [vmem:[%s1 + $0x8] sm:$0xf]
    %v21 = vld [vmem:[%s1 + $0xc] sm:$0xf]
    %v24 = vunpack.c.l.b16 %v16
    %v25 = vunpack.c.l.b16 %v17
    %v26 = vpack.c.b16 %v25, %v24
    %v31 = vunpack.c.l.b16 %v18
    %v32 = vunpack.c.l.b16 %v19
    %v33 = vunpack.c.l.b16 %v20
    %v34 = vunpack.c.l.b16 %v21
    %v35 = vpack.c.b16 %v32, %v31
    %v36 = vpack.c.b16 %v34, %v33
    %vm39 = vcmask 261120
    %v41 = vsel %vm39, %v26, 0
    %43 = vmatpush.bf16.msra.mxu0 0
    %44 = vmatpush.bf16.msra.mxu0 0
    %45 = vmatpush.bf16.msra.mxu0 0
    %46 = vmatpush.bf16.msra.mxu0 0
    %47 = vmatpush.bf16.msra.mxu0 0
    %48 = vmatpush.bf16.msra.mxu0 0
    %49 = vmatpush.bf16.msra.mxu0 %v36
    %50 = vmatpush.bf16.msra.mxu0 %v35
    %51 = vmatmul.bf16.gmra.mxu0 %v41
    %v52 = vpop.f32.mrf.mxu0
    %v53 = vadd.f32 0.0, %v52
    %v54 = vpop.f32.mrf.mxu0
    %v55 = vadd.f32 0.0, %v54
    %56 = vdwg.mxu0
    %v57 = vpack.c.bf16 %v55, %v53
    %v58 = vld [vmem:[%s2] sm:$0x3]
    %vm59 = vcmask 31744
    %v61 = vsel %vm59, %v57, 0
    %vm63 = vcmask 1041408
    %v65 = vsel %vm63, %v58, 0
    %67 = vmatpush.bf16.msra.mxu0 0
    %68 = vmatpush.bf16.msra.mxu0 0
    %69 = vmatpush.bf16.msra.mxu0 0
    %70 = vmatpush.bf16.msra.mxu0 0
    %71 = vmatpush.bf16.msra.mxu0 0
    %72 = vmatpush.bf16.msra.mxu0 0
    %73 = vmatpush.bf16.msra.mxu0 0
    %74 = vmatpush.bf16.msra.mxu0 %v65
    %75 = vmatmul.bf16.gmra.mxu0 %v61
    %v76 = vpop.f32.mrf.mxu0
    %v77 = vadd.f32 0.0, %v76
    %v78 = vpop.f32.mrf.mxu0
    %v79 = vadd.f32 0.0, %v78
    %80 = vdwg.mxu0
    %v81 = vpack.c.bf16 %v77, %v77
    %v82 = vpack.c.bf16 %v79, %v79
    %vm83 = vcmask 257024
    %84 = vst.msk [vmem:[#allocation2] sm:$0xf] %vm83, %v81
    %85 = vst.msk [vmem:[#allocation2 + $0x4] sm:$0xf] %vm83, %v82
    // Predicated region
    $region14: #{tpu_custom_call.1} parent=1 // pred_check
      _
    $region15: #{tpu_custom_call.1} parent=1 // pred_check_branch
      %87 = sbr.rel (0) target = $region17
    $region16: #{tpu_custom_call.1} parent=1 // pred_region
      %89 = vsyncadd [#allocation3], 0
      %s90 = sshll.u32 [#allocation2], 4
      %s91 = int_to_ptr.vmem [resolvable:$true] %s90
      %s92 = sshll.u32 %s3, 4
      %s93 = int_to_ptr.hbm [resolvable:$true] %s92
      %98 = dma.vmem_to_hbm [thread:$0]  %s91, 128, %s93, [#allocation3], 64, 64, 4
    $region17: #{tpu_custom_call.1} parent=1 // pred_fallthru
      _
    // Predicated region
    $region18: #{tpu_custom_call.1} parent=1 // pred_check
      _
    $region19: #{tpu_custom_call.1} parent=1 // pred_check_branch
      %100 = sbr.rel (0) target = $region21
    $region20: #{tpu_custom_call.1} parent=1 // pred_region
      %102 = dma.done [#allocation3], 128
    $region21: #{tpu_custom_call.1} parent=1 // pred_fallthru
      _
    %103 = vsyncpa [#allocation3], 1

</llo_original>
